<compile_context>
chip_gen: v5e
topology: v5e:2x2
jax: 0.10.0
libtpu: 0.0.40
codegen_flags: <defaults>
</compile_context>

<pallas_src>
import functools

import jax
import jax.numpy as jnp
from jax import lax
from jax.experimental import pallas as pl
from jax.experimental.pallas import tpu as pltpu


def _round_up(n, m):
    return ((n + m - 1) // m) * m


def _lane_round(n):
    """Lane-align a feature dim. Rounds to 128; 384 is bumped to 512 so the 256-wide
    MXUs of v6e/v7x don't run a half-width column-group tail (no extra MXU passes)."""
    d = _round_up(n, 128)
    if d == 384:
        d = 512
    return d


# ---------------------------------------------------------------------------
# Kernel: whole forward in 4 padded matmuls on one (TB, *) batch tile.
# ---------------------------------------------------------------------------
def _fused_actor_critic_kernel(x_ref, w1_ref, w23_ref, w4_ref, b123_ref, b4_ref,
                               out_ref, *, action_size):
    # shared trunk: Linear -> ReLU -> Linear -> ReLU
    h = jnp.maximum(
        jnp.dot(x_ref[...], w1_ref[...], preferred_element_type=jnp.float32)
        + b123_ref[0], 0.0)                                          # [TB, D_hid]
    h = jnp.maximum(
        jnp.dot(h, w23_ref[0], preferred_element_type=jnp.float32)
        + b123_ref[1], 0.0)                                          # [TB, D_hid]

    # fused actor/critic hidden layer: [wa1 | wc1] side by side -> one matmul
    ac = jnp.maximum(
        jnp.dot(h, w23_ref[1], preferred_element_type=jnp.float32)
        + b123_ref[2], 0.0)                                          # [TB, D_hid]

    # fused output layer (block-diagonal [wa2 ; wc2]): logits in lanes 0..A-1, value in lane A
    out = jnp.dot(ac, w4_ref[...], preferred_element_type=jnp.float32) + b4_ref[...]  # [TB, N_out]

    # masked, numerically stable softmax over the logit lanes only.
    # N_out == round_up(action_size + 1, 128), so the XLU reductions / EUP exp run
    # over a single lane group for typical action spaces.
    lane = lax.broadcasted_iota(jnp.int32, out.shape, dimension=1)
    logits = jnp.where(lane < action_size, out, -jnp.inf)
    m = jnp.max(logits, axis=-1, keepdims=True)
    e = jnp.exp(logits - m)                                          # exp(-inf) = 0 on masked lanes
    probs = e * pl.reciprocal(jnp.sum(e, axis=-1, keepdims=True), approx=False)

    # single lane-dense store: probs in lanes < A, raw value in lane A, zeros elsewhere
    out_ref[...] = jnp.where(lane == action_size, out, probs)


# ---------------------------------------------------------------------------
# Parameter packing (zero-padded, lane-aligned, non-square where it matters)
# ---------------------------------------------------------------------------
def pack_params(params):
    S, H = params["w1"].shape
    Hh = params["wa1"].shape[1]
    A = params["wa2"].shape[1]

    K_in = _lane_round(S)                    # layer-1 contraction width only
    D_hid = _lane_round(max(H, 2 * Hh))      # shared hidden width
    N_out = _lane_round(A + 1)               # fused logits+value output width

    f32 = jnp.float32
    w1 = jnp.zeros((K_in, D_hid), f32).at[:S, :H].set(params["w1"])
    w2 = jnp.zeros((D_hid, D_hid), f32).at[:H, :H].set(params["w2"])
    w3 = (jnp.zeros((D_hid, D_hid), f32)
          .at[:H, :Hh].set(params["wa1"])
          .at[:H, Hh:2 * Hh].set(params["wc1"]))
    w23 = jnp.stack([w2, w3])                                        # [2, D_hid, D_hid]
    w4 = (jnp.zeros((D_hid, N_out), f32)
          .at[:Hh, :A].set(params["wa2"])
          .at[Hh:2 * Hh, A:A + 1].set(params["wc2"]))                # [D_hid, N_out]

    b1 = jnp.zeros((1, D_hid), f32).at[:, :H].set(params["b1"])
    b2 = jnp.zeros((1, D_hid), f32).at[:, :H].set(params["b2"])
    b3 = (jnp.zeros((1, D_hid), f32)
          .at[:, :Hh].set(params["ba1"])
          .at[:, Hh:2 * Hh].set(params["bc1"]))
    b123 = jnp.stack([b1, b2, b3])                                   # [3, 1, D_hid]
    b4 = (jnp.zeros((1, N_out), f32)
          .at[:, :A].set(params["ba2"])
          .at[:, A:A + 1].set(params["bc2"]))                        # [1, N_out]

    dims = dict(K_in=K_in, D_hid=D_hid, N_out=N_out, state_size=S, action_size=A)
    return (w1, w23, w4, b123, b4), dims


def _batch_tiling(B, block_b):
    # Enough tiles that each tile <= block_b; at least 2 tiles once the batch is worth
    # splitting so v7x's second TensorCore gets work.  TB sized from cdiv(B, n_tiles) so
    # batch padding is always < one tile (no up-to-2x padded-batch blowup).
    n_tiles = max(1, -(-B // block_b))
    if n_tiles < 2 and B >= 16:
        n_tiles = 2
    TB = _round_up(-(-B // n_tiles), 8)
    Bpad = _round_up(B, TB)
    return TB, Bpad


def _vmem_limit_bytes(TB, K_in, D_hid, N_out, single_buffer_weights):
    wmul = 1 if single_buffer_weights else 2
    w_bytes = 4 * wmul * (K_in * D_hid + 2 * D_hid * D_hid + D_hid * N_out
                          + 3 * D_hid + N_out)                # resident weights / biases
    io_bytes = 2 * 4 * TB * (K_in + N_out)                    # double-buffered x / out tiles
    act_bytes = 4 * 4 * TB * D_hid                            # h / ac / softmax temporaries headroom
    est = w_bytes + io_bytes + act_bytes + (2 << 20)
    try:
        cap = pltpu.get_tpu_info().vmem_capacity_bytes        # 128 MiB v5e/v6e, 64 MiB/TC on v7x
    except Exception:
        cap = 64 << 20
    return int(min(max(est, 32 << 20), cap))


def _build_call(TB, Bpad, K_in, D_hid, N_out, action_size, single_buffer_weights):
    kernel = functools.partial(_fused_actor_critic_kernel, action_size=action_size)

    def const_spec(shape):
        zeros = (0,) * len(shape)
        if single_buffer_weights:
            # Constant index_map -> fetched once; second pipeline buffer is pure VMEM waste.
            return pl.BlockSpec(shape, lambda i, _z=zeros: _z,
                                pipeline_mode=pl.Buffered(buffer_count=1))
        return pl.BlockSpec(shape, lambda i, _z=zeros: _z)

    return pl.pallas_call(
        kernel,
        out_shape=jax.ShapeDtypeStruct((Bpad, N_out), jnp.float32),
        grid=(Bpad // TB,),
        in_specs=[
            pl.BlockSpec((TB, K_in), lambda i: (i, 0)),   # x tile per grid step
            const_spec((K_in, D_hid)),                    # w1
            const_spec((2, D_hid, D_hid)),                # w2, [wa1 | wc1]
            const_spec((D_hid, N_out)),                   # block-diag [wa2 ; wc2]
            const_spec((3, 1, D_hid)),                    # b1, b2, [ba1 | bc1]
            const_spec((1, N_out)),                       # [ba2 | bc2]
        ],
        out_specs=pl.BlockSpec((TB, N_out), lambda i: (i, 0)),
        compiler_params=pltpu.CompilerParams(
            dimension_semantics=("parallel",),            # shards batch grid across TCs on v7x
            vmem_limit_bytes=_vmem_limit_bytes(TB, K_in, D_hid, N_out,
                                               single_buffer_weights),
        ),
    )


def actor_critic_forward(x, params, *, block_b=1024):
    (w1, w23, w4, b123, b4), dims = pack_params(params)
    K_in, D_hid, N_out = dims["K_in"], dims["D_hid"], dims["N_out"]
    S, A = dims["state_size"], dims["action_size"]

    B = x.shape[0]
    TB, Bpad = _batch_tiling(B, block_b)

    # lane-dense, zero-padded input slab
    x_pad = jnp.zeros((Bpad, K_in), jnp.float32).at[:B, :S].set(x)
    operands = (x_pad, w1, w23, w4, b123, b4)

    try:
        out = jax.block_until_ready(
            _build_call(TB, Bpad, K_in, D_hid, N_out, A,
                        single_buffer_weights=True)(*operands))
    except Exception:
        # Fallback if this JAX/Mosaic build rejects pl.Buffered(1) on the auto-pipeline;
        # only cost is one extra (unused) weight buffer in VMEM.
        out = _build_call(TB, Bpad, K_in, D_hid, N_out, A,
                          single_buffer_weights=False)(*operands)

    probs = out[:B, :A]
    value = out[:B, A:A + 1]
    return probs, value


# ---------------------------------------------------------------------------
# Synthetic init + plain-JAX reference (mirrors the PyTorch module exactly)
# ---------------------------------------------------------------------------
def init_params(key, state_size, action_size, hidden_size):
    half = hidden_size // 2

    def linear(key, fan_in, fan_out):
        k_w, k_b = jax.random.split(key)
        bound = 1.0 / jnp.sqrt(fan_in)
        w = jax.random.uniform(k_w, (fan_in, fan_out), jnp.float32, -bound, bound)
        b = jax.random.uniform(k_b, (1, fan_out), jnp.float32, -bound, bound)
        return w, b

    keys = jax.random.split(key, 6)
    w1, b1 = linear(keys[0], state_size, hidden_size)
    w2, b2 = linear(keys[1], hidden_size, hidden_size)
    wa1, ba1 = linear(keys[2], hidden_size, half)
    wa2, ba2 = linear(keys[3], half, action_size)
    wc1, bc1 = linear(keys[4], hidden_size, half)
    wc2, bc2 = linear(keys[5], half, 1)
    return dict(w1=w1, b1=b1, w2=w2, b2=b2,
                wa1=wa1, ba1=ba1, wa2=wa2, ba2=ba2,
                wc1=wc1, bc1=bc1, wc2=wc2, bc2=bc2)


def reference_forward(x, p):
    h = jnp.maximum(x @ p["w1"] + p["b1"], 0.0)
    h = jnp.maximum(h @ p["w2"] + p["b2"], 0.0)
    a = jnp.maximum(h @ p["wa1"] + p["ba1"], 0.0)
    logits = a @ p["wa2"] + p["ba2"]
    probs = jax.nn.softmax(logits, axis=-1)
    c = jnp.maximum(h @ p["wc1"] + p["bc1"], 0.0)
    value = c @ p["wc2"] + p["bc2"]
    return probs, value


if __name__ == "__main__":
    batch = 2
    state_size = 8
    action_size = 4
    hidden_size = 32

    key = jax.random.PRNGKey(0)
    k_x, k_p = jax.random.split(key)

    x = jax.random.normal(k_x, (batch, state_size), dtype=jnp.float32)
    params = init_params(k_p, state_size, action_size, hidden_size)

    probs, value = actor_critic_forward(x, params)
    probs, value = jax.block_until_ready((probs, value))

    ref_probs, ref_value = reference_forward(x, params)
    assert probs.shape == (batch, action_size)
    assert value.shape == (batch, 1)
    assert jnp.allclose(probs, ref_probs, atol=1e-5, rtol=1e-5)
    assert jnp.allclose(value, ref_value, atol=1e-5, rtol=1e-5)
    assert jnp.allclose(jnp.sum(probs, axis=-1), 1.0, atol=1e-5)

    print("KERNEL_OK")
</pallas_src>

<mosaic_0001>
module attributes {stable_mosaic.version = 11 : i64} {
  func.func @_fused_actor_critic_kernel(%arg0: i32, %arg1: memref<8x128xf32, #tpu.memory_space<vmem>>, %arg2: memref<128x128xf32, #tpu.memory_space<vmem>>, %arg3: memref<2x128x128xf32, #tpu.memory_space<vmem>>, %arg4: memref<128x128xf32, #tpu.memory_space<vmem>>, %arg5: memref<3x1x128xf32, #tpu.memory_space<vmem>>, %arg6: memref<1x128xf32, #tpu.memory_space<vmem>>, %arg7: memref<8x128xf32, #tpu.memory_space<vmem>>) attributes {dimension_semantics = [#tpu.dimension_semantics<parallel>], iteration_bounds = array<i64: 1>, scalar_prefetch = 0 : i64, scratch_operands = 0 : i64, tpu.core_type = #tpu.core_type<tc>, window_params = [{transform_indices = @transform_0, window_bounds = array<i64: 8, 128>}, {pipeline_mode = #tpu.pipeline_mode<synchronous>, transform_indices = @transform_1, window_bounds = array<i64: 128, 128>}, {pipeline_mode = #tpu.pipeline_mode<synchronous>, transform_indices = @transform_2, window_bounds = array<i64: 2, 128, 128>}, {pipeline_mode = #tpu.pipeline_mode<synchronous>, transform_indices = @transform_3, window_bounds = array<i64: 128, 128>}, {pipeline_mode = #tpu.pipeline_mode<synchronous>, transform_indices = @transform_4, window_bounds = array<i64: 3, 1, 128>}, {pipeline_mode = #tpu.pipeline_mode<synchronous>, transform_indices = @transform_5, window_bounds = array<i64: 1, 128>}, {transform_indices = @transform_6, window_bounds = array<i64: 8, 128>}]} {
    %c0 = arith.constant 0 : index
    %c0_0 = arith.constant 0 : index
    %0 = vector.load %arg1[%c0, %c0_0] : memref<8x128xf32, #tpu.memory_space<vmem>>, vector<8x128xf32>
    %c0_1 = arith.constant 0 : index
    %c0_2 = arith.constant 0 : index
    %1 = vector.load %arg2[%c0_1, %c0_2] : memref<128x128xf32, #tpu.memory_space<vmem>>, vector<128x128xf32>
    %cst = arith.constant dense<0.000000e+00> : vector<8x128xf32>
    %2 = tpu.matmul %0, %1, %cst {dimension_numbers = #tpu.dot_dimension_numbers<[1], [0], [0], [1], [0, 0, 1, 1], [], []>} : vector<8x128xf32>, vector<128x128xf32>, vector<8x128xf32> -> vector<8x128xf32>
    %c0_3 = arith.constant 0 : index
    %c0_4 = arith.constant 0 : index
    %c0_5 = arith.constant 0 : index
    %3 = vector.load %arg5[%c0_3, %c0_4, %c0_5] : memref<3x1x128xf32, #tpu.memory_space<vmem>>, vector<1x1x128xf32>
    %4 = vector.shape_cast %3 : vector<1x1x128xf32> to vector<1x128xf32>
    %5 = vector.broadcast %4 : vector<1x128xf32> to vector<8x128xf32>
    %6 = arith.addf %2, %5 : vector<8x128xf32>
    %cst_6 = arith.constant 0.000000e+00 : f32
    %7 = vector.broadcast %cst_6 : f32 to vector<8x128xf32>
    %8 = arith.maximumf %6, %7 : vector<8x128xf32>
    %c0_7 = arith.constant 0 : index
    %c0_8 = arith.constant 0 : index
    %c0_9 = arith.constant 0 : index
    %9 = vector.load %arg3[%c0_7, %c0_8, %c0_9] : memref<2x128x128xf32, #tpu.memory_space<vmem>>, vector<1x128x128xf32>
    %10 = vector.shape_cast %9 : vector<1x128x128xf32> to vector<128x128xf32>
    %cst_10 = arith.constant dense<0.000000e+00> : vector<8x128xf32>
    %11 = tpu.matmul %8, %10, %cst_10 {dimension_numbers = #tpu.dot_dimension_numbers<[1], [0], [0], [1], [0, 0, 1, 1], [], []>} : vector<8x128xf32>, vector<128x128xf32>, vector<8x128xf32> -> vector<8x128xf32>
    %c1 = arith.constant 1 : index
    %c0_11 = arith.constant 0 : index
    %c0_12 = arith.constant 0 : index
    %12 = vector.load %arg5[%c1, %c0_11, %c0_12] : memref<3x1x128xf32, #tpu.memory_space<vmem>>, vector<1x1x128xf32>
    %13 = vector.shape_cast %12 : vector<1x1x128xf32> to vector<1x128xf32>
    %14 = vector.broadcast %13 : vector<1x128xf32> to vector<8x128xf32>
    %15 = arith.addf %11, %14 : vector<8x128xf32>
    %cst_13 = arith.constant 0.000000e+00 : f32
    %16 = vector.broadcast %cst_13 : f32 to vector<8x128xf32>
    %17 = arith.maximumf %15, %16 : vector<8x128xf32>
    %c1_14 = arith.constant 1 : index
    %c0_15 = arith.constant 0 : index
    %c0_16 = arith.constant 0 : index
    %18 = vector.load %arg3[%c1_14, %c0_15, %c0_16] : memref<2x128x128xf32, #tpu.memory_space<vmem>>, vector<1x128x128xf32>
    %19 = vector.shape_cast %18 : vector<1x128x128xf32> to vector<128x128xf32>
    %cst_17 = arith.constant dense<0.000000e+00> : vector<8x128xf32>
    %20 = tpu.matmul %17, %19, %cst_17 {dimension_numbers = #tpu.dot_dimension_numbers<[1], [0], [0], [1], [0, 0, 1, 1], [], []>} : vector<8x128xf32>, vector<128x128xf32>, vector<8x128xf32> -> vector<8x128xf32>
    %c2 = arith.constant 2 : index
    %c0_18 = arith.constant 0 : index
    %c0_19 = arith.constant 0 : index
    %21 = vector.load %arg5[%c2, %c0_18, %c0_19] : memref<3x1x128xf32, #tpu.memory_space<vmem>>, vector<1x1x128xf32>
    %22 = vector.shape_cast %21 : vector<1x1x128xf32> to vector<1x128xf32>
    %23 = vector.broadcast %22 : vector<1x128xf32> to vector<8x128xf32>
    %24 = arith.addf %20, %23 : vector<8x128xf32>
    %cst_20 = arith.constant 0.000000e+00 : f32
    %25 = vector.broadcast %cst_20 : f32 to vector<8x128xf32>
    %26 = arith.maximumf %24, %25 : vector<8x128xf32>
    %c0_21 = arith.constant 0 : index
    %c0_22 = arith.constant 0 : index
    %27 = vector.load %arg4[%c0_21, %c0_22] : memref<128x128xf32, #tpu.memory_space<vmem>>, vector<128x128xf32>
    %cst_23 = arith.constant dense<0.000000e+00> : vector<8x128xf32>
    %28 = tpu.matmul %26, %27, %cst_23 {dimension_numbers = #tpu.dot_dimension_numbers<[1], [0], [0], [1], [0, 0, 1, 1], [], []>} : vector<8x128xf32>, vector<128x128xf32>, vector<8x128xf32> -> vector<8x128xf32>
    %c0_24 = arith.constant 0 : index
    %c0_25 = arith.constant 0 : index
    %29 = vector.load %arg6[%c0_24, %c0_25] : memref<1x128xf32, #tpu.memory_space<vmem>>, vector<1x128xf32>
    %30 = vector.broadcast %29 : vector<1x128xf32> to vector<8x128xf32>
    %31 = arith.addf %28, %30 : vector<8x128xf32>
    %32 = tpu.iota {dimensions = array<i32: 1>} : vector<8x128xi32>
    %c4_i32 = arith.constant 4 : i32
    %33 = vector.broadcast %c4_i32 : i32 to vector<8x128xi32>
    %34 = arith.cmpi slt, %32, %33 : vector<8x128xi32>
    %cst_26 = arith.constant 0xFF800000 : f32
    %35 = vector.broadcast %cst_26 : f32 to vector<8x128xf32>
    %36 = arith.select %34, %31, %35 : vector<8x128xi1>, vector<8x128xf32>
    %cst_27 = arith.constant dense<0xFF800000> : vector<8xf32>
    %37 = vector.multi_reduction <maximumf>, %36, %cst_27 [1] : vector<8x128xf32> to vector<8xf32>
    %38 = vector.shape_cast %37 : vector<8xf32> to vector<8x1xf32>
    %39 = vector.broadcast %38 : vector<8x1xf32> to vector<8x128xf32>
    %40 = arith.subf %36, %39 : vector<8x128xf32>
    %41 = math.exp %40 : vector<8x128xf32>
    %cst_28 = arith.constant dense<0.000000e+00> : vector<8xf32>
    %42 = vector.multi_reduction <add>, %41, %cst_28 [1] : vector<8x128xf32> to vector<8xf32>
    %43 = vector.shape_cast %42 : vector<8xf32> to vector<8x1xf32>
    %44 = tpu.reciprocal %43 : vector<8x1xf32> -> vector<8x1xf32>
    %45 = vector.broadcast %44 : vector<8x1xf32> to vector<8x128xf32>
    %46 = arith.mulf %41, %45 : vector<8x128xf32>
    %c4_i32_29 = arith.constant 4 : i32
    %47 = vector.broadcast %c4_i32_29 : i32 to vector<8x128xi32>
    %48 = arith.cmpi eq, %32, %47 : vector<8x128xi32>
    %49 = arith.select %48, %31, %46 : vector<8x128xi1>, vector<8x128xf32>
    %c0_30 = arith.constant 0 : index
    %c0_31 = arith.constant 0 : index
    %50 = vector.load %arg7[%c0_30, %c0_31] : memref<8x128xf32, #tpu.memory_space<vmem>>, vector<8x128xf32>
    tpu.vector_store %arg7[%c0_30, %c0_31], %49 {strides = array<i32>} : memref<8x128xf32, #tpu.memory_space<vmem>>, vector<8x128xf32>,
    return
  }
  func.func @transform_0(%arg0: i32) -> (i32, i32) {
    %c0_i32 = arith.constant 0 : i32
    %c0_i32_0 = arith.constant 0 : i32
    return %arg0, %c0_i32 : i32, i32
  }
  func.func @transform_1(%arg0: i32) -> (i32, i32) {
    %c0_i32 = arith.constant 0 : i32
    %c0_i32_0 = arith.constant 0 : i32
    %c0_i32_1 = arith.constant 0 : i32
    return %c0_i32, %c0_i32_0 : i32, i32
  }
  func.func @transform_2(%arg0: i32) -> (i32, i32, i32) {
    %c0_i32 = arith.constant 0 : i32
    %c0_i32_0 = arith.constant 0 : i32
    %c0_i32_1 = arith.constant 0 : i32
    %c0_i32_2 = arith.constant 0 : i32
    return %c0_i32, %c0_i32_0, %c0_i32_1 : i32, i32, i32
  }
  func.func @transform_3(%arg0: i32) -> (i32, i32) {
    %c0_i32 = arith.constant 0 : i32
    %c0_i32_0 = arith.constant 0 : i32
    %c0_i32_1 = arith.constant 0 : i32
    return %c0_i32, %c0_i32_0 : i32, i32
  }
  func.func @transform_4(%arg0: i32) -> (i32, i32, i32) {
    %c0_i32 = arith.constant 0 : i32
    %c0_i32_0 = arith.constant 0 : i32
    %c0_i32_1 = arith.constant 0 : i32
    %c0_i32_2 = arith.constant 0 : i32
    return %c0_i32, %c0_i32_0, %c0_i32_1 : i32, i32, i32
  }
  func.func @transform_5(%arg0: i32) -> (i32, i32) {
    %c0_i32 = arith.constant 0 : i32
    %c0_i32_0 = arith.constant 0 : i32
    %c0_i32_1 = arith.constant 0 : i32
    return %c0_i32, %c0_i32_0 : i32, i32
  }
  func.func @transform_6(%arg0: i32) -> (i32, i32) {
    %c0_i32 = arith.constant 0 : i32
    %c0_i32_0 = arith.constant 0 : i32
    return %arg0, %c0_i32 : i32, i32
  }
}

module attributes {stable_mosaic.version = 11 : i64} {
  func.func @_fused_actor_critic_kernel(%arg0: i32, %arg1: memref<8x128xf32, #tpu.memory_space<vmem>>, %arg2: memref<128x128xf32, #tpu.memory_space<vmem>>, %arg3: memref<2x128x128xf32, #tpu.memory_space<vmem>>, %arg4: memref<128x128xf32, #tpu.memory_space<vmem>>, %arg5: memref<3x1x128xf32, #tpu.memory_space<vmem>>, %arg6: memref<1x128xf32, #tpu.memory_space<vmem>>, %arg7: memref<8x128xf32, #tpu.memory_space<vmem>>) attributes {dimension_semantics = [#tpu.dimension_semantics<parallel>], iteration_bounds = array<i64: 1>, scalar_prefetch = 0 : i64, scratch_operands = 0 : i64, tpu.core_type = #tpu.core_type<tc>, window_params = [{transform_indices = @transform_0, window_bounds = array<i64: 8, 128>}, {pipeline_mode = #tpu.pipeline_mode<synchronous>, transform_indices = @transform_1, window_bounds = array<i64: 128, 128>}, {pipeline_mode = #tpu.pipeline_mode<synchronous>, transform_indices = @transform_2, window_bounds = array<i64: 2, 128, 128>}, {pipeline_mode = #tpu.pipeline_mode<synchronous>, transform_indices = @transform_3, window_bounds = array<i64: 128, 128>}, {pipeline_mode = #tpu.pipeline_mode<synchronous>, transform_indices = @transform_4, window_bounds = array<i64: 3, 1, 128>}, {pipeline_mode = #tpu.pipeline_mode<synchronous>, transform_indices = @transform_5, window_bounds = array<i64: 1, 128>}, {transform_indices = @transform_6, window_bounds = array<i64: 8, 128>}]} {
    %c0 = arith.constant 0 : index
    %c0_0 = arith.constant 0 : index
    %0 = vector.load %arg1[%c0, %c0_0] : memref<8x128xf32, #tpu.memory_space<vmem>>, vector<8x128xf32>
    %c0_1 = arith.constant 0 : index
    %c0_2 = arith.constant 0 : index
    %1 = vector.load %arg2[%c0_1, %c0_2] : memref<128x128xf32, #tpu.memory_space<vmem>>, vector<128x128xf32>
    %cst = arith.constant dense<0.000000e+00> : vector<8x128xf32>
    %2 = tpu.matmul %0, %1, %cst {dimension_numbers = #tpu.dot_dimension_numbers<[1], [0], [0], [1], [0, 0, 1, 1], [], []>} : vector<8x128xf32>, vector<128x128xf32>, vector<8x128xf32> -> vector<8x128xf32>
    %c0_3 = arith.constant 0 : index
    %c0_4 = arith.constant 0 : index
    %c0_5 = arith.constant 0 : index
    %3 = vector.load %arg5[%c0_3, %c0_4, %c0_5] : memref<3x1x128xf32, #tpu.memory_space<vmem>>, vector<1x1x128xf32>
    %4 = vector.shape_cast %3 : vector<1x1x128xf32> to vector<1x128xf32>
    %5 = vector.broadcast %4 : vector<1x128xf32> to vector<8x128xf32>
    %6 = arith.addf %2, %5 : vector<8x128xf32>
    %cst_6 = arith.constant 0.000000e+00 : f32
    %7 = vector.broadcast %cst_6 : f32 to vector<8x128xf32>
    %8 = arith.maximumf %6, %7 : vector<8x128xf32>
    %c0_7 = arith.constant 0 : index
    %c0_8 = arith.constant 0 : index
    %c0_9 = arith.constant 0 : index
    %9 = vector.load %arg3[%c0_7, %c0_8, %c0_9] : memref<2x128x128xf32, #tpu.memory_space<vmem>>, vector<1x128x128xf32>
    %10 = vector.shape_cast %9 : vector<1x128x128xf32> to vector<128x128xf32>
    %cst_10 = arith.constant dense<0.000000e+00> : vector<8x128xf32>
    %11 = tpu.matmul %8, %10, %cst_10 {dimension_numbers = #tpu.dot_dimension_numbers<[1], [0], [0], [1], [0, 0, 1, 1], [], []>} : vector<8x128xf32>, vector<128x128xf32>, vector<8x128xf32> -> vector<8x128xf32>
    %c1 = arith.constant 1 : index
    %c0_11 = arith.constant 0 : index
    %c0_12 = arith.constant 0 : index
    %12 = vector.load %arg5[%c1, %c0_11, %c0_12] : memref<3x1x128xf32, #tpu.memory_space<vmem>>, vector<1x1x128xf32>
    %13 = vector.shape_cast %12 : vector<1x1x128xf32> to vector<1x128xf32>
    %14 = vector.broadcast %13 : vector<1x128xf32> to vector<8x128xf32>
    %15 = arith.addf %11, %14 : vector<8x128xf32>
    %cst_13 = arith.constant 0.000000e+00 : f32
    %16 = vector.broadcast %cst_13 : f32 to vector<8x128xf32>
    %17 = arith.maximumf %15, %16 : vector<8x128xf32>
    %c1_14 = arith.constant 1 : index
    %c0_15 = arith.constant 0 : index
    %c0_16 = arith.constant 0 : index
    %18 = vector.load %arg3[%c1_14, %c0_15, %c0_16] : memref<2x128x128xf32, #tpu.memory_space<vmem>>, vector<1x128x128xf32>
    %19 = vector.shape_cast %18 : vector<1x128x128xf32> to vector<128x128xf32>
    %cst_17 = arith.constant dense<0.000000e+00> : vector<8x128xf32>
    %20 = tpu.matmul %17, %19, %cst_17 {dimension_numbers = #tpu.dot_dimension_numbers<[1], [0], [0], [1], [0, 0, 1, 1], [], []>} : vector<8x128xf32>, vector<128x128xf32>, vector<8x128xf32> -> vector<8x128xf32>
    %c2 = arith.constant 2 : index
    %c0_18 = arith.constant 0 : index
    %c0_19 = arith.constant 0 : index
    %21 = vector.load %arg5[%c2, %c0_18, %c0_19] : memref<3x1x128xf32, #tpu.memory_space<vmem>>, vector<1x1x128xf32>
    %22 = vector.shape_cast %21 : vector<1x1x128xf32> to vector<1x128xf32>
    %23 = vector.broadcast %22 : vector<1x128xf32> to vector<8x128xf32>
    %24 = arith.addf %20, %23 : vector<8x128xf32>
    %cst_20 = arith.constant 0.000000e+00 : f32
    %25 = vector.broadcast %cst_20 : f32 to vector<8x128xf32>
    %26 = arith.maximumf %24, %25 : vector<8x128xf32>
    %c0_21 = arith.constant 0 : index
    %c0_22 = arith.constant 0 : index
    %27 = vector.load %arg4[%c0_21, %c0_22] : memref<128x128xf32, #tpu.memory_space<vmem>>, vector<128x128xf32>
    %cst_23 = arith.constant dense<0.000000e+00> : vector<8x128xf32>
    %28 = tpu.matmul %26, %27, %cst_23 {dimension_numbers = #tpu.dot_dimension_numbers<[1], [0], [0], [1], [0, 0, 1, 1], [], []>} : vector<8x128xf32>, vector<128x128xf32>, vector<8x128xf32> -> vector<8x128xf32>
    %c0_24 = arith.constant 0 : index
    %c0_25 = arith.constant 0 : index
    %29 = vector.load %arg6[%c0_24, %c0_25] : memref<1x128xf32, #tpu.memory_space<vmem>>, vector<1x128xf32>
    %30 = vector.broadcast %29 : vector<1x128xf32> to vector<8x128xf32>
    %31 = arith.addf %28, %30 : vector<8x128xf32>
    %32 = tpu.iota {dimensions = array<i32: 1>} : vector<8x128xi32>
    %c4_i32 = arith.constant 4 : i32
    %33 = vector.broadcast %c4_i32 : i32 to vector<8x128xi32>
    %34 = arith.cmpi slt, %32, %33 : vector<8x128xi32>
    %cst_26 = arith.constant 0xFF800000 : f32
    %35 = vector.broadcast %cst_26 : f32 to vector<8x128xf32>
    %36 = arith.select %34, %31, %35 : vector<8x128xi1>, vector<8x128xf32>
    %cst_27 = arith.constant dense<0xFF800000> : vector<8xf32>
    %37 = vector.multi_reduction <maximumf>, %36, %cst_27 [1] : vector<8x128xf32> to vector<8xf32>
    %38 = vector.shape_cast %37 : vector<8xf32> to vector<8x1xf32>
    %39 = vector.broadcast %38 : vector<8x1xf32> to vector<8x128xf32>
    %40 = arith.subf %36, %39 : vector<8x128xf32>
    %41 = math.exp %40 : vector<8x128xf32>
    %cst_28 = arith.constant dense<0.000000e+00> : vector<8xf32>
    %42 = vector.multi_reduction <add>, %41, %cst_28 [1] : vector<8x128xf32> to vector<8xf32>
    %43 = vector.shape_cast %42 : vector<8xf32> to vector<8x1xf32>
    %44 = tpu.reciprocal %43 : vector<8x1xf32> -> vector<8x1xf32>
    %45 = vector.broadcast %44 : vector<8x1xf32> to vector<8x128xf32>
    %46 = arith.mulf %41, %45 : vector<8x128xf32>
    %c4_i32_29 = arith.constant 4 : i32
    %47 = vector.broadcast %c4_i32_29 : i32 to vector<8x128xi32>
    %48 = arith.cmpi eq, %32, %47 : vector<8x128xi32>
    %49 = arith.select %48, %31, %46 : vector<8x128xi1>, vector<8x128xf32>
    %c0_30 = arith.constant 0 : index
    %c0_31 = arith.constant 0 : index
    %50 = vector.load %arg7[%c0_30, %c0_31] : memref<8x128xf32, #tpu.memory_space<vmem>>, vector<8x128xf32>
    tpu.vector_store %arg7[%c0_30, %c0_31], %49 {strides = array<i32>} : memref<8x128xf32, #tpu.memory_space<vmem>>, vector<8x128xf32>,
    return
  }
  func.func @transform_0(%arg0: i32) -> (i32, i32) {
    %c0_i32 = arith.constant 0 : i32
    %c0_i32_0 = arith.constant 0 : i32
    return %arg0, %c0_i32 : i32, i32
  }
  func.func @transform_1(%arg0: i32) -> (i32, i32) {
    %c0_i32 = arith.constant 0 : i32
    %c0_i32_0 = arith.constant 0 : i32
    %c0_i32_1 = arith.constant 0 : i32
    return %c0_i32, %c0_i32_0 : i32, i32
  }
  func.func @transform_2(%arg0: i32) -> (i32, i32, i32) {
    %c0_i32 = arith.constant 0 : i32
    %c0_i32_0 = arith.constant 0 : i32
    %c0_i32_1 = arith.constant 0 : i32
    %c0_i32_2 = arith.constant 0 : i32
    return %c0_i32, %c0_i32_0, %c0_i32_1 : i32, i32, i32
  }
  func.func @transform_3(%arg0: i32) -> (i32, i32) {
    %c0_i32 = arith.constant 0 : i32
    %c0_i32_0 = arith.constant 0 : i32
    %c0_i32_1 = arith.constant 0 : i32
    return %c0_i32, %c0_i32_0 : i32, i32
  }
  func.func @transform_4(%arg0: i32) -> (i32, i32, i32) {
    %c0_i32 = arith.constant 0 : i32
    %c0_i32_0 = arith.constant 0 : i32
    %c0_i32_1 = arith.constant 0 : i32
    %c0_i32_2 = arith.constant 0 : i32
    return %c0_i32, %c0_i32_0, %c0_i32_1 : i32, i32, i32
  }
  func.func @transform_5(%arg0: i32) -> (i32, i32) {
    %c0_i32 = arith.constant 0 : i32
    %c0_i32_0 = arith.constant 0 : i32
    %c0_i32_1 = arith.constant 0 : i32
    return %c0_i32, %c0_i32_0 : i32, i32
  }
  func.func @transform_6(%arg0: i32) -> (i32, i32) {
    %c0_i32 = arith.constant 0 : i32
    %c0_i32_0 = arith.constant 0 : i32
    return %arg0, %c0_i32 : i32, i32
  }
}

</mosaic_0001>

<llo_original>
// kernel: tpu_custom_call.1
$region0: #{tpu_custom_call.1}
  #allocation0 [shape = 'u32[]', space=smem, size = 0x4, offset = 0x4, fixed_abs, tag = 'smem constant byte address 0x4 - core index']
  #allocation1 [shape = 'u32[72,128]{1,0:T(1,128)}', space=vmem, size = 0x9000, scoped, tag = 'internal scratch']
  %s0 = inlined_call_operand.hbm [shape: f32[8,128], index: 0, kind: input, shape index: {}]
  %s1 = inlined_call_operand.hbm [shape: f32[128,128], index: 1, kind: input, shape index: {}]
  %s2 = inlined_call_operand.hbm [shape: f32[2,128,128], index: 2, kind: input, shape index: {}]
  %s3 = inlined_call_operand.hbm [shape: f32[128,128], index: 3, kind: input, shape index: {}]
  %s4 = inlined_call_operand.vmem [shape: f32[3,1,128], index: 4, kind: input, shape index: {}]
  %s5 = inlined_call_operand.vmem [shape: f32[1,128], index: 5, kind: input, shape index: {}]
  %s6 = inlined_call_operand.hbm [shape: f32[8,128], index: 6, kind: output, shape index: {}]
  %s7 = sld [smem:[#allocation0]]
  $region50: #{tpu_custom_call.1} parent=0
    _
  %s9 = ssub.s32 1, %s7
  %s10 = scalar_select 0, %s9, %s7
  $region1: #{tpu_custom_call.1} parent=0
    #allocation2 [shape = 'u8[4096]{0}', space=vmem, size = 0x1000, scoped, tag = 'input window, operand 0, single buffered']
    #allocation3 [shape = 's32[1]{0}', space=sflag, size = 0x4, scoped, tag = 'scoped memory for tpu_custom_call.1']
    #allocation4 [shape = 's32[1]{0}', space=sflag, size = 0x4, scoped, tag = 'scoped memory for tpu_custom_call.1']
    #allocation5 [shape = 'u8[65536]{0}', space=vmem, size = 0x10000, scoped, tag = 'input window, operand 1, single buffered']
    #allocation6 [shape = 's32[1]{0}', space=sflag, size = 0x4, scoped, tag = 'scoped memory for tpu_custom_call.1']
    #allocation7 [shape = 'u8[131072]{0}', space=vmem, size = 0x20000, scoped, tag = 'input window, operand 2, single buffered']
    #allocation8 [shape = 'u8[65536]{0}', space=vmem, size = 0x10000, scoped, tag = 'input window, operand 3, single buffered']
    #allocation9 [shape = 's32[1]{0}', space=sflag, size = 0x4, scoped, tag = 'scoped memory for tpu_custom_call.1']
    #allocation10 [shape = 'u8[4096]{0}', space=vmem, size = 0x1000, scoped, tag = 'output window, operand 0, single buffered']
    %11 = vsyncpa [#allocation3], 0
    %12 = vsyncpa [#allocation6], 0
    %13 = vsyncpa [#allocation9], 0
    %14 = vsyncpa [#allocation4], 0
    // Predicated region
    $region2: #{tpu_custom_call.1} parent=1 // pred_check
      _
    $region3: #{tpu_custom_call.1} parent=1 // pred_check_branch
      %16 = sbr.rel (0) target = $region5
    $region4: #{tpu_custom_call.1} parent=1 // pred_region
      %18 = vsyncadd [#allocation3], 0
      %s20 = sshll.u32 %s0, 4
      %s21 = int_to_ptr.hbm [resolvable:$true] %s20
      %s22 = sshll.u32 [#allocation2], 4
      %s23 = int_to_ptr.vmem [resolvable:$true] %s22
      %25 = dma.hbm_to_vmem [thread:$0]  %s21, 128, %s23, [#allocation3]
    $region5: #{tpu_custom_call.1} parent=1 // pred_fallthru
      _
    // Predicated region
    $region6: #{tpu_custom_call.1} parent=1 // pred_check
      _
    $region7: #{tpu_custom_call.1} parent=1 // pred_check_branch
      %27 = sbr.rel (0) target = $region9
    $region8: #{tpu_custom_call.1} parent=1 // pred_region
      %29 = vsyncadd [#allocation6], 0
      %s30 = sshll.u32 %s1, 4
      %s31 = int_to_ptr.hbm [resolvable:$true] %s30
      %s32 = sshll.u32 [#allocation5], 4
      %s33 = int_to_ptr.vmem [resolvable:$true] %s32
      %38 = dma.hbm_to_vmem [thread:$0]  %s31, 2048, %s33, [#allocation6], 128, 128, 8
    $region9: #{tpu_custom_call.1} parent=1 // pred_fallthru
      _
    // Predicated region
    $region10: #{tpu_custom_call.1} parent=1 // pred_check
      _
    $region11: #{tpu_custom_call.1} parent=1 // pred_check_branch
      %40 = sbr.rel (0) target = $region13
    $region12: #{tpu_custom_call.1} parent=1 // pred_region
      %42 = vsyncadd [#allocation6], 0
      %s43 = sshll.u32 %s2, 4
      %s44 = int_to_ptr.hbm [resolvable:$true] %s43
      %s45 = sshll.u32 [#allocation7], 4
      %s46 = int_to_ptr.vmem [resolvable:$true] %s45
      %51 = dma.hbm_to_vmem [thread:$0]  %s44, 4096, %s46, [#allocation6], 128, 128, 8
    $region13: #{tpu_custom_call.1} parent=1 // pred_fallthru
      _
    // Predicated region
    $region14: #{tpu_custom_call.1} parent=1 // pred_check
      _
    $region15: #{tpu_custom_call.1} parent=1 // pred_check_branch
      %53 = sbr.rel (0) target = $region17
    $region16: #{tpu_custom_call.1} parent=1 // pred_region
      %55 = vsyncadd [#allocation9], 0
      %s56 = sshll.u32 %s3, 4
      %s57 = int_to_ptr.hbm [resolvable:$true] %s56
      %s58 = sshll.u32 [#allocation8], 4
      %s59 = int_to_ptr.vmem [resolvable:$true] %s58
      %64 = dma.hbm_to_vmem [thread:$0]  %s57, 2048, %s59, [#allocation9], 128, 128, 8
    $region17: #{tpu_custom_call.1} parent=1 // pred_fallthru
      _
    // Predicated region
    $region18: #{tpu_custom_call.1} parent=1 // pred_check
      _
    $region19: #{tpu_custom_call.1} parent=1 // pred_check_branch
      %66 = sbr.rel (0) target = $region21
    $region20: #{tpu_custom_call.1} parent=1 // pred_region
      _
    $region21: #{tpu_custom_call.1} parent=1 // pred_fallthru
      _
    // Predicated region
    $region22: #{tpu_custom_call.1} parent=1 // pred_check
      _
    $region23: #{tpu_custom_call.1} parent=1 // pred_check_branch
      %68 = sbr.rel (0) target = $region25
    $region24: #{tpu_custom_call.1} parent=1 // pred_region
      _
    $region25: #{tpu_custom_call.1} parent=1 // pred_fallthru
      _
    // Predicated region
    $region26: #{tpu_custom_call.1} parent=1 // pred_check
      _
    $region27: #{tpu_custom_call.1} parent=1 // pred_check_branch
      %70 = sbr.rel (0) target = $region29
    $region28: #{tpu_custom_call.1} parent=1 // pred_region
      %72 = dma.done [#allocation3], 128
    $region29: #{tpu_custom_call.1} parent=1 // pred_fallthru
      _
    // Predicated region
    $region30: #{tpu_custom_call.1} parent=1 // pred_check
      _
    $region31: #{tpu_custom_call.1} parent=1 // pred_check_branch
      %74 = sbr.rel (0) target = $region33
    $region32: #{tpu_custom_call.1} parent=1 // pred_region
      %76 = dma.done [#allocation6], 2048
    $region33: #{tpu_custom_call.1} parent=1 // pred_fallthru
      _
    // Predicated region
    $region34: #{tpu_custom_call.1} parent=1 // pred_check
      _
    $region35: #{tpu_custom_call.1} parent=1 // pred_check_branch
      %78 = sbr.rel (0) target = $region37
    $region36: #{tpu_custom_call.1} parent=1 // pred_region
      %80 = dma.done [#allocation6], 4096
    $region37: #{tpu_custom_call.1} parent=1 // pred_fallthru
      _
    // Predicated region
    $region38: #{tpu_custom_call.1} parent=1 // pred_check
      _
    $region39: #{tpu_custom_call.1} parent=1 // pred_check_branch
      %82 = sbr.rel (0) target = $region41
    $region40: #{tpu_custom_call.1} parent=1 // pred_region
      %84 = dma.done [#allocation9], 2048
    $region41: #{tpu_custom_call.1} parent=1 // pred_fallthru
      _
    %v85 = vld [vmem:[#allocation2] sm:$0xff]
    %v86 = vld [vmem:[#allocation5] sm:$0xff]
    %v87 = vld [vmem:[#allocation5 + $0x8] sm:$0xff]
    %v88 = vld [vmem:[#allocation5 + $0x10] sm:$0xff]
    %v89 = vld [vmem:[#allocation5 + $0x18] sm:$0xff]
    %v90 = vld [vmem:[#allocation5 + $0x20] sm:$0xff]
    %v91 = vld [vmem:[#allocation5 + $0x28] sm:$0xff]
    %v92 = vld [vmem:[#allocation5 + $0x30] sm:$0xff]
    %v93 = vld [vmem:[#allocation5 + $0x38] sm:$0xff]
    %v94 = vld [vmem:[#allocation5 + $0x40] sm:$0xff]
    %v95 = vld [vmem:[#allocation5 + $0x48] sm:$0xff]
    %v96 = vld [vmem:[#allocation5 + $0x50] sm:$0xff]
    %v97 = vld [vmem:[#allocation5 + $0x58] sm:$0xff]
    %v98 = vld [vmem:[#allocation5 + $0x60] sm:$0xff]
    %v99 = vld [vmem:[#allocation5 + $0x68] sm:$0xff]
    %v100 = vld [vmem:[#allocation5 + $0x70] sm:$0xff]
    %v101 = vld [vmem:[#allocation5 + $0x78] sm:$0xff]
    %v102 = vld [vmem:[%s4] sm:$0x1]
    %v104 = vperm.slane %v102, 0
    %106 = vmatpush.msra.mxu0 %v101
    %107 = vmatpush.msra.mxu0 %v100
    %108 = vmatpush.msra.mxu0 %v99
    %109 = vmatpush.msra.mxu0 %v98
    %110 = vmatpush.msra.mxu0 %v97
    %111 = vmatpush.msra.mxu0 %v96
    %112 = vmatpush.msra.mxu0 %v95
    %113 = vmatpush.msra.mxu0 %v94
    %114 = vmatpush.msra.mxu0 %v93
    %115 = vmatpush.msra.mxu0 %v92
    %116 = vmatpush.msra.mxu0 %v91
    %117 = vmatpush.msra.mxu0 %v90
    %118 = vmatpush.msra.mxu0 %v89
    %119 = vmatpush.msra.mxu0 %v88
    %120 = vmatpush.msra.mxu0 %v87
    %121 = vmatpush.msra.mxu0 %v86
    %122 = vmatmul.f32.gmra.mxu0 %v85
    %v123 = vpop.f32.mrf.mxu0
    %v124 = vadd.f32 %v104, %v123
    %125 = vdwg.mxu0
    %v126 = vmax.f32 %v124, 0.0
    %v127 = vld [vmem:[#allocation7] sm:$0xff]
    %v128 = vld [vmem:[#allocation7 + $0x8] sm:$0xff]
    %v129 = vld [vmem:[#allocation7 + $0x10] sm:$0xff]
    %v130 = vld [vmem:[#allocation7 + $0x18] sm:$0xff]
    %v131 = vld [vmem:[#allocation7 + $0x20] sm:$0xff]
    %v132 = vld [vmem:[#allocation7 + $0x28] sm:$0xff]
    %v133 = vld [vmem:[#allocation7 + $0x30] sm:$0xff]
    %v134 = vld [vmem:[#allocation7 + $0x38] sm:$0xff]
    %v135 = vld [vmem:[#allocation7 + $0x40] sm:$0xff]
    %v136 = vld [vmem:[#allocation7 + $0x48] sm:$0xff]
    %v137 = vld [vmem:[#allocation7 + $0x50] sm:$0xff]
    %v138 = vld [vmem:[#allocation7 + $0x58] sm:$0xff]
    %v139 = vld [vmem:[#allocation7 + $0x60] sm:$0xff]
    %v140 = vld [vmem:[#allocation7 + $0x68] sm:$0xff]
    %v141 = vld [vmem:[#allocation7 + $0x70] sm:$0xff]
    %v142 = vld [vmem:[#allocation7 + $0x78] sm:$0xff]
    %s143 = scalar_lea.vmem %s4, 1
    %v144 = vld [vmem:[%s143] sm:$0x1]
    %v146 = vperm.slane %v144, 0
    %148 = vmatpush.msra.mxu0 %v142
    %149 = vmatpush.msra.mxu0 %v141
    %150 = vmatpush.msra.mxu0 %v140
    %151 = vmatpush.msra.mxu0 %v139
    %152 = vmatpush.msra.mxu0 %v138
    %153 = vmatpush.msra.mxu0 %v137
    %154 = vmatpush.msra.mxu0 %v136
    %155 = vmatpush.msra.mxu0 %v135
    %156 = vmatpush.msra.mxu0 %v134
    %157 = vmatpush.msra.mxu0 %v133
    %158 = vmatpush.msra.mxu0 %v132
    %159 = vmatpush.msra.mxu0 %v131
    %160 = vmatpush.msra.mxu0 %v130
    %161 = vmatpush.msra.mxu0 %v129
    %162 = vmatpush.msra.mxu0 %v128
    %163 = vmatpush.msra.mxu0 %v127
    %164 = vmatmul.f32.gmra.mxu0 %v126
    %v165 = vpop.f32.mrf.mxu0
    %v166 = vadd.f32 %v146, %v165
    %167 = vdwg.mxu0
    %v168 = vmax.f32 %v166, 0.0
    %s169 = scalar_lea.vmem [#allocation7], 128
    %v170 = vld [vmem:[%s169] sm:$0xff]
    %v171 = vld [vmem:[%s169 + $0x8] sm:$0xff]
    %v172 = vld [vmem:[%s169 + $0x10] sm:$0xff]
    %v173 = vld [vmem:[%s169 + $0x18] sm:$0xff]
    %v174 = vld [vmem:[%s169 + $0x20] sm:$0xff]
    %v175 = vld [vmem:[%s169 + $0x28] sm:$0xff]
    %v176 = vld [vmem:[%s169 + $0x30] sm:$0xff]
    %v177 = vld [vmem:[%s169 + $0x38] sm:$0xff]
    %v178 = vld [vmem:[%s169 + $0x40] sm:$0xff]
    %v179 = vld [vmem:[%s169 + $0x48] sm:$0xff]
    %v180 = vld [vmem:[%s169 + $0x50] sm:$0xff]
    %v181 = vld [vmem:[%s169 + $0x58] sm:$0xff]
    %v182 = vld [vmem:[%s169 + $0x60] sm:$0xff]
    %v183 = vld [vmem:[%s169 + $0x68] sm:$0xff]
    %v184 = vld [vmem:[%s169 + $0x70] sm:$0xff]
    %v185 = vld [vmem:[%s169 + $0x78] sm:$0xff]
    %s186 = scalar_lea.vmem %s4, 2
    %v187 = vld [vmem:[%s186] sm:$0x1]
    %v189 = vperm.slane %v187, 0
    %191 = vmatpush.msra.mxu0 %v185
    %192 = vmatpush.msra.mxu0 %v184
    %193 = vmatpush.msra.mxu0 %v183
    %194 = vmatpush.msra.mxu0 %v182
    %195 = vmatpush.msra.mxu0 %v181
    %196 = vmatpush.msra.mxu0 %v180
    %197 = vmatpush.msra.mxu0 %v179
    %198 = vmatpush.msra.mxu0 %v178
    %199 = vmatpush.msra.mxu0 %v177
    %200 = vmatpush.msra.mxu0 %v176
    %201 = vmatpush.msra.mxu0 %v175
    %202 = vmatpush.msra.mxu0 %v174
    %203 = vmatpush.msra.mxu0 %v173
    %204 = vmatpush.msra.mxu0 %v172
    %205 = vmatpush.msra.mxu0 %v171
    %206 = vmatpush.msra.mxu0 %v170
    %207 = vmatmul.f32.gmra.mxu0 %v168
    %v208 = vpop.f32.mrf.mxu0
    %v209 = vadd.f32 %v189, %v208
    %210 = vdwg.mxu0
    %v211 = vmax.f32 %v209, 0.0
    %v212 = vld [vmem:[#allocation8] sm:$0xff]
    %v213 = vld [vmem:[#allocation8 + $0x8] sm:$0xff]
    %v214 = vld [vmem:[#allocation8 + $0x10] sm:$0xff]
    %v215 = vld [vmem:[#allocation8 + $0x18] sm:$0xff]
    %v216 = vld [vmem:[#allocation8 + $0x20] sm:$0xff]
    %v217 = vld [vmem:[#allocation8 + $0x28] sm:$0xff]
    %v218 = vld [vmem:[#allocation8 + $0x30] sm:$0xff]
    %v219 = vld [vmem:[#allocation8 + $0x38] sm:$0xff]
    %v220 = vld [vmem:[#allocation8 + $0x40] sm:$0xff]
    %v221 = vld [vmem:[#allocation8 + $0x48] sm:$0xff]
    %v222 = vld [vmem:[#allocation8 + $0x50] sm:$0xff]
    %v223 = vld [vmem:[#allocation8 + $0x58] sm:$0xff]
    %v224 = vld [vmem:[#allocation8 + $0x60] sm:$0xff]
    %v225 = vld [vmem:[#allocation8 + $0x68] sm:$0xff]
    %v226 = vld [vmem:[#allocation8 + $0x70] sm:$0xff]
    %v227 = vld [vmem:[#allocation8 + $0x78] sm:$0xff]
    %v228 = vld [vmem:[%s5] sm:$0x1]
    %v230 = vperm.slane %v228, 0
    %232 = vmatpush.msra.mxu0 %v227
    %233 = vmatpush.msra.mxu0 %v226
    %234 = vmatpush.msra.mxu0 %v225
    %235 = vmatpush.msra.mxu0 %v224
    %236 = vmatpush.msra.mxu0 %v223
    %237 = vmatpush.msra.mxu0 %v222
    %238 = vmatpush.msra.mxu0 %v221
    %239 = vmatpush.msra.mxu0 %v220
    %240 = vmatpush.msra.mxu0 %v219
    %241 = vmatpush.msra.mxu0 %v218
    %242 = vmatpush.msra.mxu0 %v217
    %243 = vmatpush.msra.mxu0 %v216
    %244 = vmatpush.msra.mxu0 %v215
    %245 = vmatpush.msra.mxu0 %v214
    %246 = vmatpush.msra.mxu0 %v213
    %247 = vmatpush.msra.mxu0 %v212
    %248 = vmatmul.f32.gmra.mxu0 %v211
    %v249 = vpop.f32.mrf.mxu0
    %v250 = vadd.f32 %v230, %v249
    %251 = vdwg.mxu0
    %v252 = vlaneseq
    %v253 = vand.u32 %v252, 127
    %vm254 = vcmp.lt.s32.totalorder %v253, 4
    %v255 = vsel %vm254, %v250, -inf
    %256 = vmax.xlane.f32.xlu0 %v255
    %v257 = vpop.xlane.xlu0 %256
    %v258 = vsub.f32 %v255, %v257
    %v259 = vmul.f32 %v258, 1.442695
    %v260 = vpow.pop %v259
    %261 = vadd.xlane.f32.xlu0 %v260
    %v262 = vpop.xlane.xlu0 %261
    %v263 = vrcp.pop %v262
    %v264 = vmul.f32 %v262, %v263
    %v265 = vsub.f32 1.0, %v264
    %v266 = vmul.f32 %v263, %v265
    %v267 = vadd.f32 %v263, %v266
    %vm268 = vweird.f32 %v262
    %vm269 = vweird.f32 %v263
    %vm270 = vmor %vm268, %vm269
    %v271 = vsel %vm270, %v263, %v267
    %v272 = vand.u32 2147483647, %v262
    %vm273 = vcmp.eq.f32.partialorder %v272, 8.507059e+37
    %v274 = vand.u32 %v262, 2147483648
    %v275 = vor.u32 1.1754944e-38, %v274
    %v276 = vsel %vm273, %v275, %v271
    %v277 = vmul.f32 %v260, %v276
    %vm278 = vcmp.eq.s32.totalorder %v253, 4
    %v279 = vsel %vm278, %v250, %v277
    %280 = vst [vmem:[#allocation10] sm:$0xff] %v279
    // Predicated region
    $region42: #{tpu_custom_call.1} parent=1 // pred_check
      _
    $region43: #{tpu_custom_call.1} parent=1 // pred_check_branch
      %282 = sbr.rel (0) target = $region45
    $region44: #{tpu_custom_call.1} parent=1 // pred_region
      %284 = vsyncadd [#allocation4], 0
      %s286 = sshll.u32 [#allocation10], 4
      %s287 = int_to_ptr.vmem [resolvable:$true] %s286
      %s288 = sshll.u32 %s6, 4
      %s289 = int_to_ptr.hbm [resolvable:$true] %s288
      %291 = dma.vmem_to_hbm [thread:$0]  %s287, 128, %s289, [#allocation4]
    $region45: #{tpu_custom_call.1} parent=1 // pred_fallthru
      _
    // Predicated region
    $region46: #{tpu_custom_call.1} parent=1 // pred_check
      _
    $region47: #{tpu_custom_call.1} parent=1 // pred_check_branch
      %293 = sbr.rel (0) target = $region49
    $region48: #{tpu_custom_call.1} parent=1 // pred_region
      %295 = dma.done [#allocation4], 128
    $region49: #{tpu_custom_call.1} parent=1 // pred_fallthru
      _
    %296 = vsyncpa [#allocation3], 1
    %297 = vsyncpa [#allocation6], 1
    %298 = vsyncpa [#allocation9], 1
    %299 = vsyncpa [#allocation4], 1

// kernel: tpu_custom_call.1
$region0: #{tpu_custom_call.1}
  #allocation0 [shape = 'u32[]', space=smem, size = 0x4, offset = 0x4, fixed_abs, tag = 'smem constant byte address 0x4 - core index']
  #allocation1 [shape = 'u32[72,128]{1,0:T(1,128)}', space=vmem, size = 0x9000, scoped, tag = 'internal scratch']
  %s0 = inlined_call_operand.hbm [shape: f32[8,128], index: 0, kind: input, shape index: {}]
  %s1 = inlined_call_operand.hbm [shape: f32[128,128], index: 1, kind: input, shape index: {}]
  %s2 = inlined_call_operand.hbm [shape: f32[2,128,128], index: 2, kind: input, shape index: {}]
  %s3 = inlined_call_operand.hbm [shape: f32[128,128], index: 3, kind: input, shape index: {}]
  %s4 = inlined_call_operand.vmem [shape: f32[3,1,128], index: 4, kind: input, shape index: {}]
  %s5 = inlined_call_operand.vmem [shape: f32[1,128], index: 5, kind: input, shape index: {}]
  %s6 = inlined_call_operand.hbm [shape: f32[8,128], index: 6, kind: output, shape index: {}]
  %s7 = sld [smem:[#allocation0]]
  $region50: #{tpu_custom_call.1} parent=0
    _
  %s9 = ssub.s32 1, %s7
  %s10 = scalar_select 0, %s9, %s7
  $region1: #{tpu_custom_call.1} parent=0
    #allocation2 [shape = 'u8[4096]{0}', space=vmem, size = 0x1000, scoped, tag = 'input window, operand 0, single buffered']
    #allocation3 [shape = 's32[1]{0}', space=sflag, size = 0x4, scoped, tag = 'scoped memory for tpu_custom_call.1']
    #allocation4 [shape = 's32[1]{0}', space=sflag, size = 0x4, scoped, tag = 'scoped memory for tpu_custom_call.1']
    #allocation5 [shape = 'u8[65536]{0}', space=vmem, size = 0x10000, scoped, tag = 'input window, operand 1, single buffered']
    #allocation6 [shape = 's32[1]{0}', space=sflag, size = 0x4, scoped, tag = 'scoped memory for tpu_custom_call.1']
    #allocation7 [shape = 'u8[131072]{0}', space=vmem, size = 0x20000, scoped, tag = 'input window, operand 2, single buffered']
    #allocation8 [shape = 'u8[65536]{0}', space=vmem, size = 0x10000, scoped, tag = 'input window, operand 3, single buffered']
    #allocation9 [shape = 's32[1]{0}', space=sflag, size = 0x4, scoped, tag = 'scoped memory for tpu_custom_call.1']
    #allocation10 [shape = 'u8[4096]{0}', space=vmem, size = 0x1000, scoped, tag = 'output window, operand 0, single buffered']
    %11 = vsyncpa [#allocation3], 0
    %12 = vsyncpa [#allocation6], 0
    %13 = vsyncpa [#allocation9], 0
    %14 = vsyncpa [#allocation4], 0
    // Predicated region
    $region2: #{tpu_custom_call.1} parent=1 // pred_check
      _
    $region3: #{tpu_custom_call.1} parent=1 // pred_check_branch
      %16 = sbr.rel (0) target = $region5
    $region4: #{tpu_custom_call.1} parent=1 // pred_region
      %18 = vsyncadd [#allocation3], 0
      %s20 = sshll.u32 %s0, 4
      %s21 = int_to_ptr.hbm [resolvable:$true] %s20
      %s22 = sshll.u32 [#allocation2], 4
      %s23 = int_to_ptr.vmem [resolvable:$true] %s22
      %25 = dma.hbm_to_vmem [thread:$0]  %s21, 128, %s23, [#allocation3]
    $region5: #{tpu_custom_call.1} parent=1 // pred_fallthru
      _
    // Predicated region
    $region6: #{tpu_custom_call.1} parent=1 // pred_check
      _
    $region7: #{tpu_custom_call.1} parent=1 // pred_check_branch
      %27 = sbr.rel (0) target = $region9
    $region8: #{tpu_custom_call.1} parent=1 // pred_region
      %29 = vsyncadd [#allocation6], 0
      %s30 = sshll.u32 %s1, 4
      %s31 = int_to_ptr.hbm [resolvable:$true] %s30
      %s32 = sshll.u32 [#allocation5], 4
      %s33 = int_to_ptr.vmem [resolvable:$true] %s32
      %38 = dma.hbm_to_vmem [thread:$0]  %s31, 2048, %s33, [#allocation6], 128, 128, 8
    $region9: #{tpu_custom_call.1} parent=1 // pred_fallthru
      _
    // Predicated region
    $region10: #{tpu_custom_call.1} parent=1 // pred_check
      _
    $region11: #{tpu_custom_call.1} parent=1 // pred_check_branch
      %40 = sbr.rel (0) target = $region13
    $region12: #{tpu_custom_call.1} parent=1 // pred_region
      %42 = vsyncadd [#allocation6], 0
      %s43 = sshll.u32 %s2, 4
      %s44 = int_to_ptr.hbm [resolvable:$true] %s43
      %s45 = sshll.u32 [#allocation7], 4
      %s46 = int_to_ptr.vmem [resolvable:$true] %s45
      %51 = dma.hbm_to_vmem [thread:$0]  %s44, 4096, %s46, [#allocation6], 128, 128, 8
    $region13: #{tpu_custom_call.1} parent=1 // pred_fallthru
      _
    // Predicated region
    $region14: #{tpu_custom_call.1} parent=1 // pred_check
      _
    $region15: #{tpu_custom_call.1} parent=1 // pred_check_branch
      %53 = sbr.rel (0) target = $region17
    $region16: #{tpu_custom_call.1} parent=1 // pred_region
      %55 = vsyncadd [#allocation9], 0
      %s56 = sshll.u32 %s3, 4
      %s57 = int_to_ptr.hbm [resolvable:$true] %s56
      %s58 = sshll.u32 [#allocation8], 4
      %s59 = int_to_ptr.vmem [resolvable:$true] %s58
      %64 = dma.hbm_to_vmem [thread:$0]  %s57, 2048, %s59, [#allocation9], 128, 128, 8
    $region17: #{tpu_custom_call.1} parent=1 // pred_fallthru
      _
    // Predicated region
    $region18: #{tpu_custom_call.1} parent=1 // pred_check
      _
    $region19: #{tpu_custom_call.1} parent=1 // pred_check_branch
      %66 = sbr.rel (0) target = $region21
    $region20: #{tpu_custom_call.1} parent=1 // pred_region
      _
    $region21: #{tpu_custom_call.1} parent=1 // pred_fallthru
      _
    // Predicated region
    $region22: #{tpu_custom_call.1} parent=1 // pred_check
      _
    $region23: #{tpu_custom_call.1} parent=1 // pred_check_branch
      %68 = sbr.rel (0) target = $region25
    $region24: #{tpu_custom_call.1} parent=1 // pred_region
      _
    $region25: #{tpu_custom_call.1} parent=1 // pred_fallthru
      _
    // Predicated region
    $region26: #{tpu_custom_call.1} parent=1 // pred_check
      _
    $region27: #{tpu_custom_call.1} parent=1 // pred_check_branch
      %70 = sbr.rel (0) target = $region29
    $region28: #{tpu_custom_call.1} parent=1 // pred_region
      %72 = dma.done [#allocation3], 128
    $region29: #{tpu_custom_call.1} parent=1 // pred_fallthru
      _
    // Predicated region
    $region30: #{tpu_custom_call.1} parent=1 // pred_check
      _
    $region31: #{tpu_custom_call.1} parent=1 // pred_check_branch
      %74 = sbr.rel (0) target = $region33
    $region32: #{tpu_custom_call.1} parent=1 // pred_region
      %76 = dma.done [#allocation6], 2048
    $region33: #{tpu_custom_call.1} parent=1 // pred_fallthru
      _
    // Predicated region
    $region34: #{tpu_custom_call.1} parent=1 // pred_check
      _
    $region35: #{tpu_custom_call.1} parent=1 // pred_check_branch
      %78 = sbr.rel (0) target = $region37
    $region36: #{tpu_custom_call.1} parent=1 // pred_region
      %80 = dma.done [#allocation6], 4096
    $region37: #{tpu_custom_call.1} parent=1 // pred_fallthru
      _
    // Predicated region
    $region38: #{tpu_custom_call.1} parent=1 // pred_check
      _
    $region39: #{tpu_custom_call.1} parent=1 // pred_check_branch
      %82 = sbr.rel (0) target = $region41
    $region40: #{tpu_custom_call.1} parent=1 // pred_region
      %84 = dma.done [#allocation9], 2048
    $region41: #{tpu_custom_call.1} parent=1 // pred_fallthru
      _
    %v85 = vld [vmem:[#allocation2] sm:$0xff]
    %v86 = vld [vmem:[#allocation5] sm:$0xff]
    %v87 = vld [vmem:[#allocation5 + $0x8] sm:$0xff]
    %v88 = vld [vmem:[#allocation5 + $0x10] sm:$0xff]
    %v89 = vld [vmem:[#allocation5 + $0x18] sm:$0xff]
    %v90 = vld [vmem:[#allocation5 + $0x20] sm:$0xff]
    %v91 = vld [vmem:[#allocation5 + $0x28] sm:$0xff]
    %v92 = vld [vmem:[#allocation5 + $0x30] sm:$0xff]
    %v93 = vld [vmem:[#allocation5 + $0x38] sm:$0xff]
    %v94 = vld [vmem:[#allocation5 + $0x40] sm:$0xff]
    %v95 = vld [vmem:[#allocation5 + $0x48] sm:$0xff]
    %v96 = vld [vmem:[#allocation5 + $0x50] sm:$0xff]
    %v97 = vld [vmem:[#allocation5 + $0x58] sm:$0xff]
    %v98 = vld [vmem:[#allocation5 + $0x60] sm:$0xff]
    %v99 = vld [vmem:[#allocation5 + $0x68] sm:$0xff]
    %v100 = vld [vmem:[#allocation5 + $0x70] sm:$0xff]
    %v101 = vld [vmem:[#allocation5 + $0x78] sm:$0xff]
    %v102 = vld [vmem:[%s4] sm:$0x1]
    %v104 = vperm.slane %v102, 0
    %106 = vmatpush.msra.mxu0 %v101
    %107 = vmatpush.msra.mxu0 %v100
    %108 = vmatpush.msra.mxu0 %v99
    %109 = vmatpush.msra.mxu0 %v98
    %110 = vmatpush.msra.mxu0 %v97
    %111 = vmatpush.msra.mxu0 %v96
    %112 = vmatpush.msra.mxu0 %v95
    %113 = vmatpush.msra.mxu0 %v94
    %114 = vmatpush.msra.mxu0 %v93
    %115 = vmatpush.msra.mxu0 %v92
    %116 = vmatpush.msra.mxu0 %v91
    %117 = vmatpush.msra.mxu0 %v90
    %118 = vmatpush.msra.mxu0 %v89
    %119 = vmatpush.msra.mxu0 %v88
    %120 = vmatpush.msra.mxu0 %v87
    %121 = vmatpush.msra.mxu0 %v86
    %122 = vmatmul.f32.gmra.mxu0 %v85
    %v123 = vpop.f32.mrf.mxu0
    %v124 = vadd.f32 %v104, %v123
    %125 = vdwg.mxu0
    %v126 = vmax.f32 %v124, 0.0
    %v127 = vld [vmem:[#allocation7] sm:$0xff]
    %v128 = vld [vmem:[#allocation7 + $0x8] sm:$0xff]
    %v129 = vld [vmem:[#allocation7 + $0x10] sm:$0xff]
    %v130 = vld [vmem:[#allocation7 + $0x18] sm:$0xff]
    %v131 = vld [vmem:[#allocation7 + $0x20] sm:$0xff]
    %v132 = vld [vmem:[#allocation7 + $0x28] sm:$0xff]
    %v133 = vld [vmem:[#allocation7 + $0x30] sm:$0xff]
    %v134 = vld [vmem:[#allocation7 + $0x38] sm:$0xff]
    %v135 = vld [vmem:[#allocation7 + $0x40] sm:$0xff]
    %v136 = vld [vmem:[#allocation7 + $0x48] sm:$0xff]
    %v137 = vld [vmem:[#allocation7 + $0x50] sm:$0xff]
    %v138 = vld [vmem:[#allocation7 + $0x58] sm:$0xff]
    %v139 = vld [vmem:[#allocation7 + $0x60] sm:$0xff]
    %v140 = vld [vmem:[#allocation7 + $0x68] sm:$0xff]
    %v141 = vld [vmem:[#allocation7 + $0x70] sm:$0xff]
    %v142 = vld [vmem:[#allocation7 + $0x78] sm:$0xff]
    %s143 = scalar_lea.vmem %s4, 1
    %v144 = vld [vmem:[%s143] sm:$0x1]
    %v146 = vperm.slane %v144, 0
    %148 = vmatpush.msra.mxu0 %v142
    %149 = vmatpush.msra.mxu0 %v141
    %150 = vmatpush.msra.mxu0 %v140
    %151 = vmatpush.msra.mxu0 %v139
    %152 = vmatpush.msra.mxu0 %v138
    %153 = vmatpush.msra.mxu0 %v137
    %154 = vmatpush.msra.mxu0 %v136
    %155 = vmatpush.msra.mxu0 %v135
    %156 = vmatpush.msra.mxu0 %v134
    %157 = vmatpush.msra.mxu0 %v133
    %158 = vmatpush.msra.mxu0 %v132
    %159 = vmatpush.msra.mxu0 %v131
    %160 = vmatpush.msra.mxu0 %v130
    %161 = vmatpush.msra.mxu0 %v129
    %162 = vmatpush.msra.mxu0 %v128
    %163 = vmatpush.msra.mxu0 %v127
    %164 = vmatmul.f32.gmra.mxu0 %v126
    %v165 = vpop.f32.mrf.mxu0
    %v166 = vadd.f32 %v146, %v165
    %167 = vdwg.mxu0
    %v168 = vmax.f32 %v166, 0.0
    %s169 = scalar_lea.vmem [#allocation7], 128
    %v170 = vld [vmem:[%s169] sm:$0xff]
    %v171 = vld [vmem:[%s169 + $0x8] sm:$0xff]
    %v172 = vld [vmem:[%s169 + $0x10] sm:$0xff]
    %v173 = vld [vmem:[%s169 + $0x18] sm:$0xff]
    %v174 = vld [vmem:[%s169 + $0x20] sm:$0xff]
    %v175 = vld [vmem:[%s169 + $0x28] sm:$0xff]
    %v176 = vld [vmem:[%s169 + $0x30] sm:$0xff]
    %v177 = vld [vmem:[%s169 + $0x38] sm:$0xff]
    %v178 = vld [vmem:[%s169 + $0x40] sm:$0xff]
    %v179 = vld [vmem:[%s169 + $0x48] sm:$0xff]
    %v180 = vld [vmem:[%s169 + $0x50] sm:$0xff]
    %v181 = vld [vmem:[%s169 + $0x58] sm:$0xff]
    %v182 = vld [vmem:[%s169 + $0x60] sm:$0xff]
    %v183 = vld [vmem:[%s169 + $0x68] sm:$0xff]
    %v184 = vld [vmem:[%s169 + $0x70] sm:$0xff]
    %v185 = vld [vmem:[%s169 + $0x78] sm:$0xff]
    %s186 = scalar_lea.vmem %s4, 2
    %v187 = vld [vmem:[%s186] sm:$0x1]
    %v189 = vperm.slane %v187, 0
    %191 = vmatpush.msra.mxu0 %v185
    %192 = vmatpush.msra.mxu0 %v184
    %193 = vmatpush.msra.mxu0 %v183
    %194 = vmatpush.msra.mxu0 %v182
    %195 = vmatpush.msra.mxu0 %v181
    %196 = vmatpush.msra.mxu0 %v180
    %197 = vmatpush.msra.mxu0 %v179
    %198 = vmatpush.msra.mxu0 %v178
    %199 = vmatpush.msra.mxu0 %v177
    %200 = vmatpush.msra.mxu0 %v176
    %201 = vmatpush.msra.mxu0 %v175
    %202 = vmatpush.msra.mxu0 %v174
    %203 = vmatpush.msra.mxu0 %v173
    %204 = vmatpush.msra.mxu0 %v172
    %205 = vmatpush.msra.mxu0 %v171
    %206 = vmatpush.msra.mxu0 %v170
    %207 = vmatmul.f32.gmra.mxu0 %v168
    %v208 = vpop.f32.mrf.mxu0
    %v209 = vadd.f32 %v189, %v208
    %210 = vdwg.mxu0
    %v211 = vmax.f32 %v209, 0.0
    %v212 = vld [vmem:[#allocation8] sm:$0xff]
    %v213 = vld [vmem:[#allocation8 + $0x8] sm:$0xff]
    %v214 = vld [vmem:[#allocation8 + $0x10] sm:$0xff]
    %v215 = vld [vmem:[#allocation8 + $0x18] sm:$0xff]
    %v216 = vld [vmem:[#allocation8 + $0x20] sm:$0xff]
    %v217 = vld [vmem:[#allocation8 + $0x28] sm:$0xff]
    %v218 = vld [vmem:[#allocation8 + $0x30] sm:$0xff]
    %v219 = vld [vmem:[#allocation8 + $0x38] sm:$0xff]
    %v220 = vld [vmem:[#allocation8 + $0x40] sm:$0xff]
    %v221 = vld [vmem:[#allocation8 + $0x48] sm:$0xff]
    %v222 = vld [vmem:[#allocation8 + $0x50] sm:$0xff]
    %v223 = vld [vmem:[#allocation8 + $0x58] sm:$0xff]
    %v224 = vld [vmem:[#allocation8 + $0x60] sm:$0xff]
    %v225 = vld [vmem:[#allocation8 + $0x68] sm:$0xff]
    %v226 = vld [vmem:[#allocation8 + $0x70] sm:$0xff]
    %v227 = vld [vmem:[#allocation8 + $0x78] sm:$0xff]
    %v228 = vld [vmem:[%s5] sm:$0x1]
    %v230 = vperm.slane %v228, 0
    %232 = vmatpush.msra.mxu0 %v227
    %233 = vmatpush.msra.mxu0 %v226
    %234 = vmatpush.msra.mxu0 %v225
    %235 = vmatpush.msra.mxu0 %v224
    %236 = vmatpush.msra.mxu0 %v223
    %237 = vmatpush.msra.mxu0 %v222
    %238 = vmatpush.msra.mxu0 %v221
    %239 = vmatpush.msra.mxu0 %v220
    %240 = vmatpush.msra.mxu0 %v219
    %241 = vmatpush.msra.mxu0 %v218
    %242 = vmatpush.msra.mxu0 %v217
    %243 = vmatpush.msra.mxu0 %v216
    %244 = vmatpush.msra.mxu0 %v215
    %245 = vmatpush.msra.mxu0 %v214
    %246 = vmatpush.msra.mxu0 %v213
    %247 = vmatpush.msra.mxu0 %v212
    %248 = vmatmul.f32.gmra.mxu0 %v211
    %v249 = vpop.f32.mrf.mxu0
    %v250 = vadd.f32 %v230, %v249
    %251 = vdwg.mxu0
    %v252 = vlaneseq
    %v253 = vand.u32 %v252, 127
    %vm254 = vcmp.lt.s32.totalorder %v253, 4
    %v255 = vsel %vm254, %v250, -inf
    %256 = vmax.xlane.f32.xlu0 %v255
    %v257 = vpop.xlane.xlu0 %256
    %v258 = vsub.f32 %v255, %v257
    %v259 = vmul.f32 %v258, 1.442695
    %v260 = vpow.pop %v259
    %261 = vadd.xlane.f32.xlu0 %v260
    %v262 = vpop.xlane.xlu0 %261
    %v263 = vrcp.pop %v262
    %v264 = vmul.f32 %v262, %v263
    %v265 = vsub.f32 1.0, %v264
    %v266 = vmul.f32 %v263, %v265
    %v267 = vadd.f32 %v263, %v266
    %vm268 = vweird.f32 %v262
    %vm269 = vweird.f32 %v263
    %vm270 = vmor %vm268, %vm269
    %v271 = vsel %vm270, %v263, %v267
    %v272 = vand.u32 2147483647, %v262
    %vm273 = vcmp.eq.f32.partialorder %v272, 8.507059e+37
    %v274 = vand.u32 %v262, 2147483648
    %v275 = vor.u32 1.1754944e-38, %v274
    %v276 = vsel %vm273, %v275, %v271
    %v277 = vmul.f32 %v260, %v276
    %vm278 = vcmp.eq.s32.totalorder %v253, 4
    %v279 = vsel %vm278, %v250, %v277
    %280 = vst [vmem:[#allocation10] sm:$0xff] %v279
    // Predicated region
    $region42: #{tpu_custom_call.1} parent=1 // pred_check
      _
    $region43: #{tpu_custom_call.1} parent=1 // pred_check_branch
      %282 = sbr.rel (0) target = $region45
    $region44: #{tpu_custom_call.1} parent=1 // pred_region
      %284 = vsyncadd [#allocation4], 0
      %s286 = sshll.u32 [#allocation10], 4
      %s287 = int_to_ptr.vmem [resolvable:$true] %s286
      %s288 = sshll.u32 %s6, 4
      %s289 = int_to_ptr.hbm [resolvable:$true] %s288
      %291 = dma.vmem_to_hbm [thread:$0]  %s287, 128, %s289, [#allocation4]
    $region45: #{tpu_custom_call.1} parent=1 // pred_fallthru
      _
    // Predicated region
    $region46: #{tpu_custom_call.1} parent=1 // pred_check
      _
    $region47: #{tpu_custom_call.1} parent=1 // pred_check_branch
      %293 = sbr.rel (0) target = $region49
    $region48: #{tpu_custom_call.1} parent=1 // pred_region
      %295 = dma.done [#allocation4], 128
    $region49: #{tpu_custom_call.1} parent=1 // pred_fallthru
      _
    %296 = vsyncpa [#allocation3], 1
    %297 = vsyncpa [#allocation6], 1
    %298 = vsyncpa [#allocation9], 1
    %299 = vsyncpa [#allocation4], 1

</llo_original>
